<compile_context>
chip_gen: v7x
topology: tpu7x:2x2x1
jax: 0.10.0
libtpu: 0.0.40
codegen_flags: <defaults>
</compile_context>

<pallas_src>
import math

import jax
import jax.numpy as jnp
from jax import lax
from jax.experimental import pallas as pl
from jax.experimental.pallas import tpu as pltpu

_EPS = 1e-12                      # BertLayerNorm variance_epsilon (eps inside the sqrt)
_INV_SQRT2 = 1.0 / math.sqrt(2.0)
_LANE = 128
_SUBLANE = 8


def _round_up(x, m):
    return (x + m - 1) // m * m


# ----------------------------- kernels -------------------------------------


def _dense_gelu_ln(x_f32, w1, ln):
    """x_f32:(tm,H) f32, w1:(H,H) matmul dtype, ln:(3,H) f32 [b1;gamma;beta] -> (tm,H) f32."""
    # dense: MXU matmul (bf16/whatever in, f32 accumulate) + bias; cast happens here
    # on VPU slack instead of in a separate wrapper pass.
    h = jnp.dot(x_f32.astype(w1.dtype), w1,
                preferred_element_type=jnp.float32) + ln[0:1, :]
    # exact (erf) GELU, f32 — matches torch.nn.GELU() default
    h = 0.5 * h * (1.0 + lax.erf(h * _INV_SQRT2))
    # BertLayerNorm: two-pass stats (avoids E[x^2]-E[x]^2 cancellation), eps inside
    # the sqrt; rsqrt goes to the EUP slot.
    u = jnp.mean(h, axis=-1, keepdims=True)
    d = h - u
    var = jnp.mean(d * d, axis=-1, keepdims=True)
    hn = d * lax.rsqrt(var + _EPS)
    return ln[1:2, :] * hn + ln[2:3, :]


def _kernel_resident(x_ref, w1_ref, ln_ref, w2_ref, b2_ref, o_ref):
    """Single N step: both weights resident, fully fused."""
    hn = _dense_gelu_ln(x_ref[...], w1_ref[...], ln_ref[...])
    out = jnp.dot(hn.astype(w2_ref.dtype), w2_ref[...],
                  preferred_element_type=jnp.float32) + b2_ref[...]
    o_ref[...] = out.astype(o_ref.dtype)


def _kernel_streaming(x_ref, w1_ref, ln_ref, w2_ref, b2_ref, o_ref, hn_ref):
    """W2 streamed over the N grid axis; hn computed once per row tile (j == 0)."""
    @pl.when(pl.program_id(1) == 0)
    def _():
        hn = _dense_gelu_ln(x_ref[...], w1_ref[...], ln_ref[...])
        hn_ref[...] = hn.astype(hn_ref.dtype)

    out = jnp.dot(hn_ref[...], w2_ref[...],
                  preferred_element_type=jnp.float32) + b2_ref[...]
    o_ref[...] = out.astype(o_ref.dtype)


# --------------------------- parameter prep --------------------------------


def prepare_params(params, *, matmul_dtype=jnp.bfloat16, out_tile=_LANE):
    """One-time layout prep (transpose / pad / cast) hoisted out of the call path."""
    w1, b1, gamma, beta, w2, b2 = params
    H = w1.shape[1]
    O = w2.shape[0]
    o_pad = _round_up(O, max(_LANE, out_tile))
    return dict(
        w1_t=w1.T.astype(matmul_dtype),                                      # (H, H)
        ln=jnp.stack([b1, gamma, beta]).astype(jnp.float32),                 # (3, H)
        w2_t=jnp.pad(w2, ((0, o_pad - O), (0, 0))).T.astype(matmul_dtype),   # (H, o_pad)
        b2=jnp.pad(b2, (0, o_pad - O)).reshape(1, o_pad).astype(jnp.float32),
        hidden=H, out_size=O, o_pad=o_pad, matmul_dtype=matmul_dtype)


# ----------------------------- wrapper --------------------------------------


def _chip_info():
    """(vmem_capacity_bytes, is_v5e) with safe fallbacks."""
    vmem_cap = 128 * 1024 * 1024
    try:
        vmem_cap = int(pltpu.get_tpu_info().vmem_capacity_bytes)
    except Exception:
        pass
    kind = ""
    try:
        kind = jax.devices()[0].device_kind.lower()
    except Exception:
        pass
    is_v5e = ("v5 lite" in kind) or ("v5e" in kind) or ("v5litepod" in kind)
    return vmem_cap, is_v5e


def _pick_tn(o_pad, target=512):
    """Largest multiple of 128 <= target that divides o_pad (>=128)."""
    if o_pad <= target:
        return o_pad
    best = _LANE
    t = _LANE
    while t <= target:
        if o_pad % t == 0:
            best = t
        t += _LANE
    return best


def single_layer_fc(features, prepared, *, tm=None, tn=None):
    """features: (..., hidden) f32/bf16.  prepared: output of prepare_params.

    tm: row tile (None -> chip-aware default).  tn: decoder output tile (None ->
    keep W2 resident if it fits, else stream ~512-wide tiles).
    """
    H = prepared["hidden"]
    O = prepared["out_size"]
    o_pad = prepared["o_pad"]
    mdt = prepared["matmul_dtype"]
    mdb = jnp.dtype(mdt).itemsize
    out_dtype = features.dtype
    odb = jnp.dtype(out_dtype).itemsize

    vmem_cap, is_v5e = _chip_info()
    vmem_budget = int(vmem_cap * 0.85)   # headroom for Mosaic internal scratch

    # --- chip-aware row tile ---
    if tm is None:
        if is_v5e:
            tm = 128                      # 4x128^2 MXU, f32-only VPU, small scoped VMEM
        elif vmem_cap <= 72 * 1024 * 1024 and H >= 2048:
            tm = 128                      # v7x (64 MiB/TC): shrink f32 temps, 2x grid steps
        else:
            tm = 256

    lead = features.shape[:-1]
    x = features.reshape(-1, H).astype(jnp.float32)   # matmul-dtype cast happens in-kernel
    rows = x.shape[0]

    # 16-bit matmul dtype -> align row tiles to the (16,128) packed-sublane tile.
    row_align = 16 if mdb < 4 else _SUBLANE
    rows_a = _round_up(rows, row_align)
    if rows_a <= tm:
        # split small inputs into (up to) two row tiles so both v7x TCs get work
        tm_eff = max(row_align, _round_up(-(-rows_a // 2), row_align))
    else:
        tm_eff = tm
    rows_pad = _round_up(rows_a, tm_eff)
    if rows_pad != rows:
        x = jnp.pad(x, ((0, rows_pad - rows), (0, 0)))
    grid_m = rows_pad // tm_eff

    # --- decoder-weight residency: stream W2 over o_pad tiles if it won't fit ---
    if tn is None:
        weight_bytes = (H * H + H * o_pad) * mdb
        tn = o_pad if weight_bytes <= vmem_budget // 2 else _pick_tn(o_pad)
    assert o_pad % tn == 0 and tn % _LANE == 0, "tn must be a 128-multiple dividing o_pad"
    grid_n = o_pad // tn

    cost = pl.CostEstimate(
        flops=2 * rows_pad * H * (H + o_pad) + 12 * rows_pad * H,
        transcendentals=rows_pad * (H + 1),      # erf per element + rsqrt per row
        bytes_accessed=(rows_pad * H * 4 + (H * H + H * o_pad) * mdb
                        + rows_pad * o_pad * odb))

    def est_vmem(single_buffer):
        inv = 1 if single_buffer else 2
        w2_buf = inv if grid_n == 1 else 2
        return (inv * H * H * mdb                       # W1^T
                + w2_buf * H * tn * mdb                 # W2^T tile(s)
                + inv * _SUBLANE * H * 4                # packed LN params (3->8 sublanes)
                + w2_buf * _SUBLANE * tn * 4            # b2
                + 2 * tm_eff * H * 4                    # x tiles (f32, double buffered)
                + 2 * tm_eff * tn * odb                 # output tiles
                + (tm_eff * H * mdb if grid_n > 1 else 0)   # hn scratch
                + 4 * tm_eff * H * 4)                   # f32 intermediates headroom

    def call(single_buffer):
        def inv_spec(shape):
            # grid-invariant block: single-buffer it so the dead copy is reclaimed
            if single_buffer:
                return pl.BlockSpec(shape, lambda i, j: (0, 0),
                                    pipeline_mode=pl.Buffered(1))
            return pl.BlockSpec(shape, lambda i, j: (0, 0))

        w1_spec = inv_spec((H, H))
        ln_spec = inv_spec((3, H))
        if grid_n == 1:
            w2_spec = inv_spec((H, tn))
            b2_spec = inv_spec((1, tn))
            kernel = _kernel_resident
            scratch = []
        else:
            w2_spec = pl.BlockSpec((H, tn), lambda i, j: (0, j))
            b2_spec = pl.BlockSpec((1, tn), lambda i, j: (0, j))
            kernel = _kernel_streaming
            scratch = [pltpu.VMEM((tm_eff, H), mdt)]

        vmem_limit = int(min(vmem_budget,
                             max(2 * est_vmem(single_buffer), 32 * 1024 * 1024)))

        return pl.pallas_call(
            kernel,
            out_shape=jax.ShapeDtypeStruct((rows_pad, o_pad), out_dtype),
            grid_spec=pltpu.PrefetchScalarGridSpec(
                num_scalar_prefetch=0,
                grid=(grid_m, grid_n),
                in_specs=[
                    pl.BlockSpec((tm_eff, H), lambda i, j: (i, 0)),   # x row tile (f32)
                    w1_spec,                                           # W1^T
                    ln_spec,                                           # [b1; gamma; beta]
                    w2_spec,                                           # W2^T (resident or streamed)
                    b2_spec,                                           # decoder bias
                ],
                out_specs=pl.BlockSpec((tm_eff, tn), lambda i, j: (i, j)),
                scratch_shapes=scratch),
            compiler_params=pltpu.CompilerParams(
                dimension_semantics=("parallel", "arbitrary"),
                vmem_limit_bytes=vmem_limit),
            cost_estimate=cost,
        )(x, prepared["w1_t"], prepared["ln"], prepared["w2_t"], prepared["b2"])

    try:
        out = call(single_buffer=True)
    except Exception:
        # pl.Buffered(1) unsupported on this jax version: fall back to default
        # double-buffered invariant blocks (identical results, more VMEM).
        out = call(single_buffer=False)

    return out[:rows, :O].reshape(*lead, O)


# ----------------------------- test harness ---------------------------------


def init_params(key, hidden_size, output_size, dtype=jnp.float32):
    """Deterministic parameter init mirroring the PyTorch module's shapes."""
    k1, k2, k3, k4 = jax.random.split(key, 4)
    bound1 = 1.0 / math.sqrt(hidden_size)
    w1 = jax.random.uniform(k1, (hidden_size, hidden_size), dtype, -bound1, bound1)
    b1 = jax.random.uniform(k2, (hidden_size,), dtype, -bound1, bound1)
    gamma = jnp.ones((hidden_size,), dtype)
    beta = jnp.zeros((hidden_size,), dtype)
    w2 = jax.random.uniform(k3, (output_size, hidden_size), dtype, -bound1, bound1)
    b2 = jax.random.uniform(k4, (output_size,), dtype, -bound1, bound1)
    return (w1, b1, gamma, beta, w2, b2)


def _reference_f32(features, params):
    """Pure-JAX f32 reference (exact PyTorch semantics)."""
    w1, b1, gamma, beta, w2, b2 = params
    x = features @ w1.T + b1
    x = 0.5 * x * (1.0 + lax.erf(x * _INV_SQRT2))
    u = x.mean(-1, keepdims=True)
    s = ((x - u) ** 2).mean(-1, keepdims=True)
    x = (x - u) / jnp.sqrt(s + _EPS)
    x = gamma * x + beta
    return x @ w2.T + b2


def _reference_mxu_dtype(features, params, matmul_dtype=jnp.bfloat16):
    """Reference with the same matmul-dtype policy as the kernel (bf16 in, f32 acc)."""
    w1, b1, gamma, beta, w2, b2 = params
    x = jnp.dot(features.astype(matmul_dtype), w1.T.astype(matmul_dtype),
                preferred_element_type=jnp.float32) + b1
    x = 0.5 * x * (1.0 + lax.erf(x * _INV_SQRT2))
    u = x.mean(-1, keepdims=True)
    s = ((x - u) ** 2).mean(-1, keepdims=True)
    x = (x - u) / jnp.sqrt(s + _EPS)
    x = gamma * x + beta
    return jnp.dot(x.astype(matmul_dtype), w2.T.astype(matmul_dtype),
                   preferred_element_type=jnp.float32) + b2


if __name__ == "__main__":
    key = jax.random.PRNGKey(0)
    # (batch, seq, hidden, output_size, forced_tn):
    #   case 1: tiny shapes -> tile clamping + lane padding (64 -> 128), resident path
    #   case 2: multi-step row grid, resident weights
    #   case 3: forced tn=128 -> exercises the W2-streaming kernel (grid_n = 3)
    cases = [(2, 8, 32, 64, None),
             (2, 256, 128, 256, None),
             (2, 16, 128, 384, 128)]

    for (batch, seq, hidden, out_size, tn) in cases:
        key, kx, kp = jax.random.split(key, 3)
        features = jax.random.normal(kx, (batch, seq, hidden), jnp.float32)
        params = init_params(kp, hidden, out_size)
        prepared = prepare_params(params)      # one-time layout prep (hoisted)

        y = jax.block_until_ready(single_layer_fc(features, prepared, tn=tn))
        assert y.shape == (batch, seq, out_size)

        y_bf = _reference_mxu_dtype(features, params)
        y_f32 = _reference_f32(features, params)
        assert jnp.allclose(y, y_bf, atol=2e-2, rtol=2e-2), "mismatch vs bf16-matched ref"
        assert jnp.allclose(y, y_f32, atol=5e-2, rtol=5e-2), "mismatch vs f32 ref"

    print("KERNEL_OK")
</pallas_src>

<mosaic_0001>
module attributes {stable_mosaic.version = 11 : i64} {
  func.func @_kernel_resident(%arg0: i32, %arg1: i32, %arg2: memref<16x32xf32, #tpu.memory_space<vmem>>, %arg3: memref<32x32xbf16, #tpu.memory_space<vmem>>, %arg4: memref<3x32xf32, #tpu.memory_space<vmem>>, %arg5: memref<32x128xbf16, #tpu.memory_space<vmem>>, %arg6: memref<1x128xf32, #tpu.memory_space<vmem>>, %arg7: memref<16x128xf32, #tpu.memory_space<vmem>>) attributes {dimension_semantics = [#tpu.dimension_semantics<parallel>, #tpu.dimension_semantics<arbitrary>], iteration_bounds = array<i64: 1, 1>, scalar_prefetch = 0 : i64, scratch_operands = 0 : i64, tpu.core_type = #tpu.core_type<tc>, window_params = [{transform_indices = @transform_0, window_bounds = array<i64: 16, 32>}, {pipeline_mode = #tpu.pipeline_mode<synchronous>, transform_indices = @transform_1, window_bounds = array<i64: 32, 32>}, {pipeline_mode = #tpu.pipeline_mode<synchronous>, transform_indices = @transform_2, window_bounds = array<i64: 3, 32>}, {pipeline_mode = #tpu.pipeline_mode<synchronous>, transform_indices = @transform_3, window_bounds = array<i64: 32, 128>}, {pipeline_mode = #tpu.pipeline_mode<synchronous>, transform_indices = @transform_4, window_bounds = array<i64: 1, 128>}, {transform_indices = @transform_5, window_bounds = array<i64: 16, 128>}]} {
    %c0 = arith.constant 0 : index
    %c0_0 = arith.constant 0 : index
    %0 = vector.load %arg2[%c0, %c0_0] : memref<16x32xf32, #tpu.memory_space<vmem>>, vector<16x32xf32>
    %c0_1 = arith.constant 0 : index
    %c0_2 = arith.constant 0 : index
    %1 = vector.load %arg3[%c0_1, %c0_2] : memref<32x32xbf16, #tpu.memory_space<vmem>>, vector<32x32xbf16>
    %c0_3 = arith.constant 0 : index
    %c0_4 = arith.constant 0 : index
    %2 = vector.load %arg4[%c0_3, %c0_4] : memref<3x32xf32, #tpu.memory_space<vmem>>, vector<3x32xf32>
    %3 = arith.truncf %0 : vector<16x32xf32> to vector<16x32xbf16>
    %cst = arith.constant dense<0.000000e+00> : vector<16x32xf32>
    %4 = tpu.matmul %3, %1, %cst {dimension_numbers = #tpu.dot_dimension_numbers<[1], [0], [0], [1], [0, 0, 1, 1], [], []>} : vector<16x32xbf16>, vector<32x32xbf16>, vector<16x32xf32> -> vector<16x32xf32>
    %5 = vector.extract_strided_slice %2 {offsets = [0, 0], sizes = [1, 32], strides = [1, 1]} : vector<3x32xf32> to vector<1x32xf32>
    %6 = vector.broadcast %5 : vector<1x32xf32> to vector<16x32xf32>
    %7 = arith.addf %4, %6 : vector<16x32xf32>
    %cst_5 = arith.constant 5.000000e-01 : f32
    %8 = vector.broadcast %cst_5 : f32 to vector<16x32xf32>
    %9 = arith.mulf %8, %7 : vector<16x32xf32>
    %cst_6 = arith.constant 0.707106769 : f32
    %10 = vector.broadcast %cst_6 : f32 to vector<16x32xf32>
    %11 = arith.mulf %7, %10 : vector<16x32xf32>
    %12 = math.erf %11 : vector<16x32xf32>
    %cst_7 = arith.constant 1.000000e+00 : f32
    %13 = vector.broadcast %cst_7 : f32 to vector<16x32xf32>
    %14 = arith.addf %13, %12 : vector<16x32xf32>
    %15 = arith.mulf %9, %14 : vector<16x32xf32>
    %cst_8 = arith.constant dense<0.000000e+00> : vector<16xf32>
    %16 = vector.multi_reduction <add>, %15, %cst_8 [1] : vector<16x32xf32> to vector<16xf32>
    %17 = vector.shape_cast %16 : vector<16xf32> to vector<16x1xf32>
    %cst_9 = arith.constant 3.200000e+01 : f32
    %18 = vector.broadcast %cst_9 : f32 to vector<16x1xf32>
    %19 = arith.divf %17, %18 : vector<16x1xf32>
    %20 = vector.broadcast %19 : vector<16x1xf32> to vector<16x32xf32>
    %21 = arith.subf %15, %20 : vector<16x32xf32>
    %22 = arith.mulf %21, %21 : vector<16x32xf32>
    %cst_10 = arith.constant dense<0.000000e+00> : vector<16xf32>
    %23 = vector.multi_reduction <add>, %22, %cst_10 [1] : vector<16x32xf32> to vector<16xf32>
    %24 = vector.shape_cast %23 : vector<16xf32> to vector<16x1xf32>
    %cst_11 = arith.constant 3.200000e+01 : f32
    %25 = vector.broadcast %cst_11 : f32 to vector<16x1xf32>
    %26 = arith.divf %24, %25 : vector<16x1xf32>
    %cst_12 = arith.constant 9.99999996E-13 : f32
    %27 = vector.broadcast %cst_12 : f32 to vector<16x1xf32>
    %28 = arith.addf %26, %27 : vector<16x1xf32>
    %29 = math.rsqrt %28 : vector<16x1xf32>
    %30 = vector.broadcast %29 : vector<16x1xf32> to vector<16x32xf32>
    %31 = arith.mulf %21, %30 : vector<16x32xf32>
    %32 = vector.extract_strided_slice %2 {offsets = [1, 0], sizes = [1, 32], strides = [1, 1]} : vector<3x32xf32> to vector<1x32xf32>
    %33 = vector.broadcast %32 : vector<1x32xf32> to vector<16x32xf32>
    %34 = arith.mulf %33, %31 : vector<16x32xf32>
    %35 = vector.extract_strided_slice %2 {offsets = [2, 0], sizes = [1, 32], strides = [1, 1]} : vector<3x32xf32> to vector<1x32xf32>
    %36 = vector.broadcast %35 : vector<1x32xf32> to vector<16x32xf32>
    %37 = arith.addf %34, %36 : vector<16x32xf32>
    %38 = arith.truncf %37 : vector<16x32xf32> to vector<16x32xbf16>
    %c0_13 = arith.constant 0 : index
    %c0_14 = arith.constant 0 : index
    %39 = vector.load %arg5[%c0_13, %c0_14] : memref<32x128xbf16, #tpu.memory_space<vmem>>, vector<32x128xbf16>
    %cst_15 = arith.constant dense<0.000000e+00> : vector<16x128xf32>
    %40 = tpu.matmul %38, %39, %cst_15 {dimension_numbers = #tpu.dot_dimension_numbers<[1], [0], [0], [1], [0, 0, 1, 1], [], []>} : vector<16x32xbf16>, vector<32x128xbf16>, vector<16x128xf32> -> vector<16x128xf32>
    %c0_16 = arith.constant 0 : index
    %c0_17 = arith.constant 0 : index
    %41 = vector.load %arg6[%c0_16, %c0_17] : memref<1x128xf32, #tpu.memory_space<vmem>>, vector<1x128xf32>
    %42 = vector.broadcast %41 : vector<1x128xf32> to vector<16x128xf32>
    %43 = arith.addf %40, %42 : vector<16x128xf32>
    %c0_18 = arith.constant 0 : index
    %c0_19 = arith.constant 0 : index
    %44 = vector.load %arg7[%c0_18, %c0_19] : memref<16x128xf32, #tpu.memory_space<vmem>>, vector<16x128xf32>
    tpu.vector_store %arg7[%c0_18, %c0_19], %43 {strides = array<i32>} : memref<16x128xf32, #tpu.memory_space<vmem>>, vector<16x128xf32>,
    return
  }
  func.func @transform_0(%arg0: i32, %arg1: i32) -> (i32, i32) {
    %c0_i32 = arith.constant 0 : i32
    %c0_i32_0 = arith.constant 0 : i32
    return %arg0, %c0_i32 : i32, i32
  }
  func.func @transform_1(%arg0: i32, %arg1: i32) -> (i32, i32) {
    %c0_i32 = arith.constant 0 : i32
    %c0_i32_0 = arith.constant 0 : i32
    %c0_i32_1 = arith.constant 0 : i32
    return %c0_i32, %c0_i32_0 : i32, i32
  }
  func.func @transform_2(%arg0: i32, %arg1: i32) -> (i32, i32) {
    %c0_i32 = arith.constant 0 : i32
    %c0_i32_0 = arith.constant 0 : i32
    %c0_i32_1 = arith.constant 0 : i32
    return %c0_i32, %c0_i32_0 : i32, i32
  }
  func.func @transform_3(%arg0: i32, %arg1: i32) -> (i32, i32) {
    %c0_i32 = arith.constant 0 : i32
    %c0_i32_0 = arith.constant 0 : i32
    %c0_i32_1 = arith.constant 0 : i32
    return %c0_i32, %c0_i32_0 : i32, i32
  }
  func.func @transform_4(%arg0: i32, %arg1: i32) -> (i32, i32) {
    %c0_i32 = arith.constant 0 : i32
    %c0_i32_0 = arith.constant 0 : i32
    %c0_i32_1 = arith.constant 0 : i32
    return %c0_i32, %c0_i32_0 : i32, i32
  }
  func.func @transform_5(%arg0: i32, %arg1: i32) -> (i32, i32) {
    %c0_i32 = arith.constant 0 : i32
    return %arg0, %arg1 : i32, i32
  }
}

module attributes {stable_mosaic.version = 11 : i64} {
  func.func @_kernel_resident(%arg0: i32, %arg1: i32, %arg2: memref<16x32xf32, #tpu.memory_space<vmem>>, %arg3: memref<32x32xbf16, #tpu.memory_space<vmem>>, %arg4: memref<3x32xf32, #tpu.memory_space<vmem>>, %arg5: memref<32x128xbf16, #tpu.memory_space<vmem>>, %arg6: memref<1x128xf32, #tpu.memory_space<vmem>>, %arg7: memref<16x128xf32, #tpu.memory_space<vmem>>) attributes {dimension_semantics = [#tpu.dimension_semantics<parallel>, #tpu.dimension_semantics<arbitrary>], iteration_bounds = array<i64: 1, 1>, scalar_prefetch = 0 : i64, scratch_operands = 0 : i64, tpu.core_type = #tpu.core_type<tc>, window_params = [{transform_indices = @transform_0, window_bounds = array<i64: 16, 32>}, {pipeline_mode = #tpu.pipeline_mode<synchronous>, transform_indices = @transform_1, window_bounds = array<i64: 32, 32>}, {pipeline_mode = #tpu.pipeline_mode<synchronous>, transform_indices = @transform_2, window_bounds = array<i64: 3, 32>}, {pipeline_mode = #tpu.pipeline_mode<synchronous>, transform_indices = @transform_3, window_bounds = array<i64: 32, 128>}, {pipeline_mode = #tpu.pipeline_mode<synchronous>, transform_indices = @transform_4, window_bounds = array<i64: 1, 128>}, {transform_indices = @transform_5, window_bounds = array<i64: 16, 128>}]} {
    %c0 = arith.constant 0 : index
    %c0_0 = arith.constant 0 : index
    %0 = vector.load %arg2[%c0, %c0_0] : memref<16x32xf32, #tpu.memory_space<vmem>>, vector<16x32xf32>
    %c0_1 = arith.constant 0 : index
    %c0_2 = arith.constant 0 : index
    %1 = vector.load %arg3[%c0_1, %c0_2] : memref<32x32xbf16, #tpu.memory_space<vmem>>, vector<32x32xbf16>
    %c0_3 = arith.constant 0 : index
    %c0_4 = arith.constant 0 : index
    %2 = vector.load %arg4[%c0_3, %c0_4] : memref<3x32xf32, #tpu.memory_space<vmem>>, vector<3x32xf32>
    %3 = arith.truncf %0 : vector<16x32xf32> to vector<16x32xbf16>
    %cst = arith.constant dense<0.000000e+00> : vector<16x32xf32>
    %4 = tpu.matmul %3, %1, %cst {dimension_numbers = #tpu.dot_dimension_numbers<[1], [0], [0], [1], [0, 0, 1, 1], [], []>} : vector<16x32xbf16>, vector<32x32xbf16>, vector<16x32xf32> -> vector<16x32xf32>
    %5 = vector.extract_strided_slice %2 {offsets = [0, 0], sizes = [1, 32], strides = [1, 1]} : vector<3x32xf32> to vector<1x32xf32>
    %6 = vector.broadcast %5 : vector<1x32xf32> to vector<16x32xf32>
    %7 = arith.addf %4, %6 : vector<16x32xf32>
    %cst_5 = arith.constant 5.000000e-01 : f32
    %8 = vector.broadcast %cst_5 : f32 to vector<16x32xf32>
    %9 = arith.mulf %8, %7 : vector<16x32xf32>
    %cst_6 = arith.constant 0.707106769 : f32
    %10 = vector.broadcast %cst_6 : f32 to vector<16x32xf32>
    %11 = arith.mulf %7, %10 : vector<16x32xf32>
    %12 = math.erf %11 : vector<16x32xf32>
    %cst_7 = arith.constant 1.000000e+00 : f32
    %13 = vector.broadcast %cst_7 : f32 to vector<16x32xf32>
    %14 = arith.addf %13, %12 : vector<16x32xf32>
    %15 = arith.mulf %9, %14 : vector<16x32xf32>
    %cst_8 = arith.constant dense<0.000000e+00> : vector<16xf32>
    %16 = vector.multi_reduction <add>, %15, %cst_8 [1] : vector<16x32xf32> to vector<16xf32>
    %17 = vector.shape_cast %16 : vector<16xf32> to vector<16x1xf32>
    %cst_9 = arith.constant 3.200000e+01 : f32
    %18 = vector.broadcast %cst_9 : f32 to vector<16x1xf32>
    %19 = arith.divf %17, %18 : vector<16x1xf32>
    %20 = vector.broadcast %19 : vector<16x1xf32> to vector<16x32xf32>
    %21 = arith.subf %15, %20 : vector<16x32xf32>
    %22 = arith.mulf %21, %21 : vector<16x32xf32>
    %cst_10 = arith.constant dense<0.000000e+00> : vector<16xf32>
    %23 = vector.multi_reduction <add>, %22, %cst_10 [1] : vector<16x32xf32> to vector<16xf32>
    %24 = vector.shape_cast %23 : vector<16xf32> to vector<16x1xf32>
    %cst_11 = arith.constant 3.200000e+01 : f32
    %25 = vector.broadcast %cst_11 : f32 to vector<16x1xf32>
    %26 = arith.divf %24, %25 : vector<16x1xf32>
    %cst_12 = arith.constant 9.99999996E-13 : f32
    %27 = vector.broadcast %cst_12 : f32 to vector<16x1xf32>
    %28 = arith.addf %26, %27 : vector<16x1xf32>
    %29 = math.rsqrt %28 : vector<16x1xf32>
    %30 = vector.broadcast %29 : vector<16x1xf32> to vector<16x32xf32>
    %31 = arith.mulf %21, %30 : vector<16x32xf32>
    %32 = vector.extract_strided_slice %2 {offsets = [1, 0], sizes = [1, 32], strides = [1, 1]} : vector<3x32xf32> to vector<1x32xf32>
    %33 = vector.broadcast %32 : vector<1x32xf32> to vector<16x32xf32>
    %34 = arith.mulf %33, %31 : vector<16x32xf32>
    %35 = vector.extract_strided_slice %2 {offsets = [2, 0], sizes = [1, 32], strides = [1, 1]} : vector<3x32xf32> to vector<1x32xf32>
    %36 = vector.broadcast %35 : vector<1x32xf32> to vector<16x32xf32>
    %37 = arith.addf %34, %36 : vector<16x32xf32>
    %38 = arith.truncf %37 : vector<16x32xf32> to vector<16x32xbf16>
    %c0_13 = arith.constant 0 : index
    %c0_14 = arith.constant 0 : index
    %39 = vector.load %arg5[%c0_13, %c0_14] : memref<32x128xbf16, #tpu.memory_space<vmem>>, vector<32x128xbf16>
    %cst_15 = arith.constant dense<0.000000e+00> : vector<16x128xf32>
    %40 = tpu.matmul %38, %39, %cst_15 {dimension_numbers = #tpu.dot_dimension_numbers<[1], [0], [0], [1], [0, 0, 1, 1], [], []>} : vector<16x32xbf16>, vector<32x128xbf16>, vector<16x128xf32> -> vector<16x128xf32>
    %c0_16 = arith.constant 0 : index
    %c0_17 = arith.constant 0 : index
    %41 = vector.load %arg6[%c0_16, %c0_17] : memref<1x128xf32, #tpu.memory_space<vmem>>, vector<1x128xf32>
    %42 = vector.broadcast %41 : vector<1x128xf32> to vector<16x128xf32>
    %43 = arith.addf %40, %42 : vector<16x128xf32>
    %c0_18 = arith.constant 0 : index
    %c0_19 = arith.constant 0 : index
    %44 = vector.load %arg7[%c0_18, %c0_19] : memref<16x128xf32, #tpu.memory_space<vmem>>, vector<16x128xf32>
    tpu.vector_store %arg7[%c0_18, %c0_19], %43 {strides = array<i32>} : memref<16x128xf32, #tpu.memory_space<vmem>>, vector<16x128xf32>,
    return
  }
  func.func @transform_0(%arg0: i32, %arg1: i32) -> (i32, i32) {
    %c0_i32 = arith.constant 0 : i32
    %c0_i32_0 = arith.constant 0 : i32
    return %arg0, %c0_i32 : i32, i32
  }
  func.func @transform_1(%arg0: i32, %arg1: i32) -> (i32, i32) {
    %c0_i32 = arith.constant 0 : i32
    %c0_i32_0 = arith.constant 0 : i32
    %c0_i32_1 = arith.constant 0 : i32
    return %c0_i32, %c0_i32_0 : i32, i32
  }
  func.func @transform_2(%arg0: i32, %arg1: i32) -> (i32, i32) {
    %c0_i32 = arith.constant 0 : i32
    %c0_i32_0 = arith.constant 0 : i32
    %c0_i32_1 = arith.constant 0 : i32
    return %c0_i32, %c0_i32_0 : i32, i32
  }
  func.func @transform_3(%arg0: i32, %arg1: i32) -> (i32, i32) {
    %c0_i32 = arith.constant 0 : i32
    %c0_i32_0 = arith.constant 0 : i32
    %c0_i32_1 = arith.constant 0 : i32
    return %c0_i32, %c0_i32_0 : i32, i32
  }
  func.func @transform_4(%arg0: i32, %arg1: i32) -> (i32, i32) {
    %c0_i32 = arith.constant 0 : i32
    %c0_i32_0 = arith.constant 0 : i32
    %c0_i32_1 = arith.constant 0 : i32
    return %c0_i32, %c0_i32_0 : i32, i32
  }
  func.func @transform_5(%arg0: i32, %arg1: i32) -> (i32, i32) {
    %c0_i32 = arith.constant 0 : i32
    return %arg0, %arg1 : i32, i32
  }
}

</mosaic_0001>

<llo_original>
// kernel: tpu_custom_call.1
$region0: #{tpu_custom_call.1}
  #allocation0 [shape = 'u32[]', space=smem, size = 0x4, offset = 0x4, fixed_abs, tag = 'smem constant byte address 0x4 - core index']
  #allocation1 [shape = 'u32[144,128]{1,0:T(1,128)}', space=vmem, size = 0x12000, scoped, tag = 'internal scratch']
  %s0 = inlined_call_operand.hbm [shape: f32[16,32], index: 0, kind: input, shape index: {}]
  %s1 = inlined_call_operand.hbm [shape: bf16[32,32], index: 1, kind: input, shape index: {}]
  %s2 = inlined_call_operand.vmem [shape: f32[3,32], index: 2, kind: input, shape index: {}]
  %s3 = inlined_call_operand.hbm [shape: bf16[32,128], index: 3, kind: input, shape index: {}]
  %s4 = inlined_call_operand.vmem [shape: f32[1,128], index: 4, kind: input, shape index: {}]
  %s5 = inlined_call_operand.hbm [shape: f32[16,128], index: 5, kind: output, shape index: {}]
  %s6 = sld [smem:[#allocation0]]
  $region42: #{tpu_custom_call.1} parent=0
    _
  %s8 = ssub.s32 1, %s6
  %s9 = scalar_select 0, %s8, %s6
  $region1: #{tpu_custom_call.1} parent=0
    #allocation2 [shape = 'u8[8192]{0}', space=vmem, size = 0x2000, scoped, tag = 'input window, operand 0, single buffered']
    #allocation3 [shape = 's32[1]{0}', space=sflag, size = 0x4, scoped, tag = 'scoped memory for tpu_custom_call.1']
    #allocation4 [shape = 's32[1]{0}', space=sflag, size = 0x4, scoped, tag = 'scoped memory for tpu_custom_call.1']
    #allocation5 [shape = 'u8[8192]{0}', space=vmem, size = 0x2000, scoped, tag = 'input window, operand 1, single buffered']
    #allocation6 [shape = 's32[1]{0}', space=sflag, size = 0x4, scoped, tag = 'scoped memory for tpu_custom_call.1']
    #allocation7 [shape = 'u8[8192]{0}', space=vmem, size = 0x2000, scoped, tag = 'input window, operand 3, single buffered']
    #allocation8 [shape = 'u8[8192]{0}', space=vmem, size = 0x2000, scoped, tag = 'output window, operand 0, single buffered']
    %10 = vsyncpa [#allocation3], 0
    %11 = vsyncpa [#allocation6], 0
    %12 = vsyncpa [#allocation4], 0
    // Predicated region
    $region2: #{tpu_custom_call.1} parent=1 // pred_check
      _
    $region3: #{tpu_custom_call.1} parent=1 // pred_check_branch
      %14 = sbr.rel (0) target = $region5
    $region4: #{tpu_custom_call.1} parent=1 // pred_region
      %s16 = ssub.s32 256, 256
      %17 = vsyncadd [#allocation3], %s16
      %s18 = sshll.u32 [#allocation2], 4
      %s19 = int_to_ptr.vmem [resolvable:$true] %s18
      %24 = dma.hbm_to_vmem [thread:$0]  %s0, 256, %s19, [#allocation3], 128, 128, 8
    $region5: #{tpu_custom_call.1} parent=1 // pred_fallthru
      _
    // Predicated region
    $region6: #{tpu_custom_call.1} parent=1 // pred_check
      _
    $region7: #{tpu_custom_call.1} parent=1 // pred_check_branch
      %26 = sbr.rel (0) target = $region9
    $region8: #{tpu_custom_call.1} parent=1 // pred_region
      %s28 = ssub.s32 256, 256
      %29 = vsyncadd [#allocation6], %s28
      %s30 = sshll.u32 [#allocation5], 4
      %s31 = int_to_ptr.vmem [resolvable:$true] %s30
      %36 = dma.hbm_to_vmem [thread:$0]  %s1, 256, %s31, [#allocation6], 64, 64, 4
    $region9: #{tpu_custom_call.1} parent=1 // pred_fallthru
      _
    // Predicated region
    $region10: #{tpu_custom_call.1} parent=1 // pred_check
      _
    $region11: #{tpu_custom_call.1} parent=1 // pred_check_branch
      %38 = sbr.rel (0) target = $region13
    $region12: #{tpu_custom_call.1} parent=1 // pred_region
      _
    $region13: #{tpu_custom_call.1} parent=1 // pred_fallthru
      _
    // Predicated region
    $region14: #{tpu_custom_call.1} parent=1 // pred_check
      _
    $region15: #{tpu_custom_call.1} parent=1 // pred_check_branch
      %40 = sbr.rel (0) target = $region17
    $region16: #{tpu_custom_call.1} parent=1 // pred_region
      %s42 = ssub.s32 256, 256
      %43 = vsyncadd [#allocation6], %s42
      %s44 = sshll.u32 [#allocation7], 4
      %s45 = int_to_ptr.vmem [resolvable:$true] %s44
      %50 = dma.hbm_to_vmem [thread:$0]  %s3, 256, %s45, [#allocation6], 64, 64, 4
    $region17: #{tpu_custom_call.1} parent=1 // pred_fallthru
      _
    // Predicated region
    $region18: #{tpu_custom_call.1} parent=1 // pred_check
      _
    $region19: #{tpu_custom_call.1} parent=1 // pred_check_branch
      %52 = sbr.rel (0) target = $region21
    $region20: #{tpu_custom_call.1} parent=1 // pred_region
      _
    $region21: #{tpu_custom_call.1} parent=1 // pred_fallthru
      _
    // Predicated region
    $region22: #{tpu_custom_call.1} parent=1 // pred_check
      _
    $region23: #{tpu_custom_call.1} parent=1 // pred_check_branch
      %54 = sbr.rel (0) target = $region25
    $region24: #{tpu_custom_call.1} parent=1 // pred_region
      %55 = dma.done [#allocation3], 256
    $region25: #{tpu_custom_call.1} parent=1 // pred_fallthru
      _
    // Predicated region
    $region26: #{tpu_custom_call.1} parent=1 // pred_check
      _
    $region27: #{tpu_custom_call.1} parent=1 // pred_check_branch
      %57 = sbr.rel (0) target = $region29
    $region28: #{tpu_custom_call.1} parent=1 // pred_region
      %58 = dma.done [#allocation6], 256
    $region29: #{tpu_custom_call.1} parent=1 // pred_fallthru
      _
    // Predicated region
    $region30: #{tpu_custom_call.1} parent=1 // pred_check
      _
    $region31: #{tpu_custom_call.1} parent=1 // pred_check_branch
      %60 = sbr.rel (0) target = $region33
    $region32: #{tpu_custom_call.1} parent=1 // pred_region
      %61 = dma.done [#allocation6], 256
    $region33: #{tpu_custom_call.1} parent=1 // pred_fallthru
      _
    %v63 = vld [vmem:[#allocation2] sm:$0xff]
    %v64 = vld [vmem:[#allocation2 + $0x8] sm:$0xff]
    %v65 = vld [vmem:[#allocation5] sm:$0xf]
    %v66 = vld [vmem:[#allocation5 + $0x4] sm:$0xf]
    %v67 = vld [vmem:[#allocation5 + $0x8] sm:$0xf]
    %v68 = vld [vmem:[#allocation5 + $0xc] sm:$0xf]
    %v69 = vld [vmem:[%s2] sm:$0x7]
    %v70 = vpack.c.bf16 %v64, %v63
    %v71 = vlaneseq
    %v72 = vshrl.u32 %v71, 7
    %v73 = vsub.s32 0, %v72
    %v74 = vrot.slane %v69, %v73
    %v79 = vunpack.c.l.b16 %v65
    %v80 = vunpack.c.l.b16 %v66
    %v81 = vunpack.c.l.b16 %v67
    %v82 = vunpack.c.l.b16 %v68
    %v83 = vpack.c.b16 %v80, %v79
    %v84 = vpack.c.b16 %v82, %v81
    %vm87 = vcmask 261120
    %v89 = vsel %vm87, %v70, 0
    %91 = vmatprep.subr.bf16.mxu0 0
    %92 = vmatpush1.bf16.msra.mxu0 %v83
    %93 = vmatprep.subr.bf16.mxu0 0
    %94 = vmatpush1.bf16.msra.mxu0 %v84
    %95 = vmatprep.subr.bf16.mxu0 0
    %96 = vmatpush1.bf16.msra.mxu0 0
    %97 = vmatprep.subr.bf16.mxu0 0
    %98 = vmatpush1.bf16.msra.mxu0 0
    %99 = vmatprep.subr.bf16.mxu0 0
    %100 = vmatpush1.bf16.msra.mxu0 0
    %101 = vmatprep.subr.bf16.mxu0 0
    %102 = vmatpush1.bf16.msra.mxu0 0
    %103 = vmatprep.subr.bf16.mxu0 0
    %104 = vmatpush1.bf16.msra.mxu0 0
    %105 = vmatprep.subr.bf16.mxu0 0
    %106 = vmatpush1.bf16.msra.mxu0 0
    %107 = vmatprep.subr.bf16.mxu0 0
    %108 = vmatpush1.bf16.msra.mxu0 0
    %109 = vmatprep.subr.bf16.mxu0 0
    %110 = vmatpush1.bf16.msra.mxu0 0
    %111 = vmatprep.subr.bf16.mxu0 0
    %112 = vmatpush1.bf16.msra.mxu0 0
    %113 = vmatprep.subr.bf16.mxu0 0
    %114 = vmatpush1.bf16.msra.mxu0 0
    %115 = vmatprep.subr.bf16.mxu0 0
    %116 = vmatpush1.bf16.msra.mxu0 0
    %117 = vmatprep.subr.bf16.mxu0 0
    %118 = vmatpush1.bf16.msra.mxu0 0
    %119 = vmatprep.subr.bf16.mxu0 0
    %120 = vmatpush1.bf16.msra.mxu0 0
    %121 = vmatprep.subr.bf16.mxu0 0
    %122 = vmatpush1.bf16.msra.mxu0 0
    %123 = vmatprep.mubr.bf16.mxu0 0
    %124 = vmatmul.mubr.bf16.gmra.mrb[0].mxu0 %v89
    %v125 = vpop.f32.mrb[0].mxu0
    %v126 = vadd.f32 %v74, %v125
    %v127 = vpop.f32.mrb[0].mxu0
    %v128 = vpop.f32.mrb[0].mxu0
    %v129 = vadd.f32 %v74, %v128
    %v130 = vpop.f32.mrb[0].mxu0
    %131 = vdwg.mxu0
    %v132 = vmul.f32 %v126, 0.5
    %v133 = vmul.f32 %v129, 0.5
    %v134 = vmul.f32 %v126, 0.70710677
    %v135 = vmul.f32 %v129, 0.70710677
    %v136 = verf.f32.pop %v134
    %v137 = verf.f32.pop %v135
    %v138 = vadd.f32 %v136, 1.0
    %v139 = vadd.f32 %v137, 1.0
    %v140 = vmul.f32 %v132, %v138
    %v141 = vmul.f32 %v133, %v139
    %v142 = vsel %vm87, %v140, 0.0
    %143 = vadd.xlane.f32.xlu0 %v142
    %v144 = vpop.xlane.xlu0 %143
    %v145 = vsel %vm87, %v141, 0.0
    %146 = vadd.xlane.f32.xlu0 %v145
    %v147 = vpop.xlane.xlu0 %146
    %v148 = vrcp.pop 32.0
    %v149 = vmul.f32 %v144, %v148
    %v150 = vmul.f32 %v147, %v148
    %v151 = vsub.f32 %v140, %v149
    %v152 = vsub.f32 %v141, %v150
    %v153 = vmul.f32 %v151, %v151
    %v154 = vmul.f32 %v152, %v152
    %v155 = vsel %vm87, %v153, 0.0
    %156 = vadd.xlane.f32.xlu0 %v155
    %v157 = vpop.xlane.xlu0 %156
    %v158 = vsel %vm87, %v154, 0.0
    %159 = vadd.xlane.f32.xlu0 %v158
    %v160 = vpop.xlane.xlu0 %159
    %v161 = vmul.f32 %v157, %v148
    %v162 = vmul.f32 %v160, %v148
    %v163 = vadd.f32 %v161, 1e-12
    %v164 = vadd.f32 %v162, 1e-12
    %v165 = vrsqrt.pop %v163
    %v166 = vrsqrt.pop %v164
    %v167 = vmul.f32 %v151, %v165
    %v168 = vmul.f32 %v152, %v166
    %v169 = vlaneseq
    %v170 = vshrl.u32 %v169, 7
    %v171 = vsub.s32 1, %v170
    %v172 = vrot.slane %v69, %v171
    %v173 = vmul.f32 %v172, %v167
    %v174 = vmul.f32 %v172, %v168
    %v175 = vlaneseq
    %v176 = vshrl.u32 %v175, 7
    %v177 = vsub.s32 2, %v176
    %v178 = vrot.slane %v69, %v177
    %v179 = vadd.f32 %v173, %v178
    %v180 = vadd.f32 %v174, %v178
    %v181 = vpack.c.bf16 %v180, %v179
    %v182 = vld [vmem:[#allocation7] sm:$0xf]
    %v183 = vld [vmem:[#allocation7 + $0x4] sm:$0xf]
    %v184 = vld [vmem:[#allocation7 + $0x8] sm:$0xf]
    %v185 = vld [vmem:[#allocation7 + $0xc] sm:$0xf]
    %v186 = vld [vmem:[%s4] sm:$0x1]
    %v188 = vlaneseq
    %v189 = vshrl.u32 %v188, 7
    %v190 = vsub.s32 0, %v189
    %v191 = vrot.slane %v186, %v190
    %v197 = vunpack.c.l.b16 %v182
    %v198 = vunpack.c.l.b16 %v183
    %v199 = vunpack.c.l.b16 %v184
    %v200 = vunpack.c.l.b16 %v185
    %v201 = vpack.c.b16 %v198, %v197
    %v202 = vpack.c.b16 %v200, %v199
    %v206 = vsel %vm87, %v181, 0
    %208 = vmatprep.subr.bf16.mxu0 0
    %209 = vmatpush1.bf16.msra.mxu0 %v201
    %210 = vmatprep.subr.bf16.mxu0 0
    %211 = vmatpush1.bf16.msra.mxu0 %v202
    %212 = vmatprep.subr.bf16.mxu0 0
    %213 = vmatpush1.bf16.msra.mxu0 0
    %214 = vmatprep.subr.bf16.mxu0 0
    %215 = vmatpush1.bf16.msra.mxu0 0
    %216 = vmatprep.subr.bf16.mxu0 0
    %217 = vmatpush1.bf16.msra.mxu0 0
    %218 = vmatprep.subr.bf16.mxu0 0
    %219 = vmatpush1.bf16.msra.mxu0 0
    %220 = vmatprep.subr.bf16.mxu0 0
    %221 = vmatpush1.bf16.msra.mxu0 0
    %222 = vmatprep.subr.bf16.mxu0 0
    %223 = vmatpush1.bf16.msra.mxu0 0
    %224 = vmatprep.subr.bf16.mxu0 0
    %225 = vmatpush1.bf16.msra.mxu0 0
    %226 = vmatprep.subr.bf16.mxu0 0
    %227 = vmatpush1.bf16.msra.mxu0 0
    %228 = vmatprep.subr.bf16.mxu0 0
    %229 = vmatpush1.bf16.msra.mxu0 0
    %230 = vmatprep.subr.bf16.mxu0 0
    %231 = vmatpush1.bf16.msra.mxu0 0
    %232 = vmatprep.subr.bf16.mxu0 0
    %233 = vmatpush1.bf16.msra.mxu0 0
    %234 = vmatprep.subr.bf16.mxu0 0
    %235 = vmatpush1.bf16.msra.mxu0 0
    %236 = vmatprep.subr.bf16.mxu0 0
    %237 = vmatpush1.bf16.msra.mxu0 0
    %238 = vmatprep.subr.bf16.mxu0 0
    %239 = vmatpush1.bf16.msra.mxu0 0
    %240 = vmatprep.mubr.bf16.mxu0 0
    %241 = vmatmul.mubr.bf16.gmra.mrb[0].mxu0 %v206
    %v242 = vpop.f32.mrb[0].mxu0
    %v243 = vadd.f32 %v191, %v242
    %v244 = vpop.f32.mrb[0].mxu0
    %v245 = vpop.f32.mrb[0].mxu0
    %v246 = vadd.f32 %v191, %v245
    %v247 = vpop.f32.mrb[0].mxu0
    %248 = vdwg.mxu0
    %249 = vst [vmem:[#allocation8] sm:$0xff] %v243
    %250 = vst [vmem:[#allocation8 + $0x8] sm:$0xff] %v246
    // Predicated region
    $region34: #{tpu_custom_call.1} parent=1 // pred_check
      _
    $region35: #{tpu_custom_call.1} parent=1 // pred_check_branch
      %252 = sbr.rel (0) target = $region37
    $region36: #{tpu_custom_call.1} parent=1 // pred_region
      %s254 = ssub.s32 256, 256
      %255 = vsyncadd [#allocation4], %s254
      %s256 = sshll.u32 [#allocation8], 4
      %s257 = int_to_ptr.vmem [resolvable:$true] %s256
      %262 = dma.vmem_to_hbm [thread:$0]  %s257, 256, %s5, [#allocation4], 128, 128, 8
    $region37: #{tpu_custom_call.1} parent=1 // pred_fallthru
      _
    // Predicated region
    $region38: #{tpu_custom_call.1} parent=1 // pred_check
      _
    $region39: #{tpu_custom_call.1} parent=1 // pred_check_branch
      %264 = sbr.rel (0) target = $region41
    $region40: #{tpu_custom_call.1} parent=1 // pred_region
      %265 = dma.done [#allocation4], 256
    $region41: #{tpu_custom_call.1} parent=1 // pred_fallthru
      _
    %266 = vsyncpa [#allocation3], 1
    %267 = vsyncpa [#allocation6], 1
    %268 = vsyncpa [#allocation4], 1

// kernel: tpu_custom_call.1
$region0: #{tpu_custom_call.1}
  #allocation0 [shape = 'u32[]', space=smem, size = 0x4, offset = 0x4, fixed_abs, tag = 'smem constant byte address 0x4 - core index']
  #allocation1 [shape = 'u32[144,128]{1,0:T(1,128)}', space=vmem, size = 0x12000, scoped, tag = 'internal scratch']
  %s0 = inlined_call_operand.hbm [shape: f32[16,32], index: 0, kind: input, shape index: {}]
  %s1 = inlined_call_operand.hbm [shape: bf16[32,32], index: 1, kind: input, shape index: {}]
  %s2 = inlined_call_operand.vmem [shape: f32[3,32], index: 2, kind: input, shape index: {}]
  %s3 = inlined_call_operand.hbm [shape: bf16[32,128], index: 3, kind: input, shape index: {}]
  %s4 = inlined_call_operand.vmem [shape: f32[1,128], index: 4, kind: input, shape index: {}]
  %s5 = inlined_call_operand.hbm [shape: f32[16,128], index: 5, kind: output, shape index: {}]
  %s6 = sld [smem:[#allocation0]]
  $region42: #{tpu_custom_call.1} parent=0
    _
  %s8 = ssub.s32 1, %s6
  %s9 = scalar_select 0, %s8, %s6
  $region1: #{tpu_custom_call.1} parent=0
    #allocation2 [shape = 'u8[8192]{0}', space=vmem, size = 0x2000, scoped, tag = 'input window, operand 0, single buffered']
    #allocation3 [shape = 's32[1]{0}', space=sflag, size = 0x4, scoped, tag = 'scoped memory for tpu_custom_call.1']
    #allocation4 [shape = 's32[1]{0}', space=sflag, size = 0x4, scoped, tag = 'scoped memory for tpu_custom_call.1']
    #allocation5 [shape = 'u8[8192]{0}', space=vmem, size = 0x2000, scoped, tag = 'input window, operand 1, single buffered']
    #allocation6 [shape = 's32[1]{0}', space=sflag, size = 0x4, scoped, tag = 'scoped memory for tpu_custom_call.1']
    #allocation7 [shape = 'u8[8192]{0}', space=vmem, size = 0x2000, scoped, tag = 'input window, operand 3, single buffered']
    #allocation8 [shape = 'u8[8192]{0}', space=vmem, size = 0x2000, scoped, tag = 'output window, operand 0, single buffered']
    %10 = vsyncpa [#allocation3], 0
    %11 = vsyncpa [#allocation6], 0
    %12 = vsyncpa [#allocation4], 0
    // Predicated region
    $region2: #{tpu_custom_call.1} parent=1 // pred_check
      _
    $region3: #{tpu_custom_call.1} parent=1 // pred_check_branch
      %14 = sbr.rel (0) target = $region5
    $region4: #{tpu_custom_call.1} parent=1 // pred_region
      %s16 = ssub.s32 256, 256
      %17 = vsyncadd [#allocation3], %s16
      %s18 = sshll.u32 [#allocation2], 4
      %s19 = int_to_ptr.vmem [resolvable:$true] %s18
      %24 = dma.hbm_to_vmem [thread:$0]  %s0, 256, %s19, [#allocation3], 128, 128, 8
    $region5: #{tpu_custom_call.1} parent=1 // pred_fallthru
      _
    // Predicated region
    $region6: #{tpu_custom_call.1} parent=1 // pred_check
      _
    $region7: #{tpu_custom_call.1} parent=1 // pred_check_branch
      %26 = sbr.rel (0) target = $region9
    $region8: #{tpu_custom_call.1} parent=1 // pred_region
      %s28 = ssub.s32 256, 256
      %29 = vsyncadd [#allocation6], %s28
      %s30 = sshll.u32 [#allocation5], 4
      %s31 = int_to_ptr.vmem [resolvable:$true] %s30
      %36 = dma.hbm_to_vmem [thread:$0]  %s1, 256, %s31, [#allocation6], 64, 64, 4
    $region9: #{tpu_custom_call.1} parent=1 // pred_fallthru
      _
    // Predicated region
    $region10: #{tpu_custom_call.1} parent=1 // pred_check
      _
    $region11: #{tpu_custom_call.1} parent=1 // pred_check_branch
      %38 = sbr.rel (0) target = $region13
    $region12: #{tpu_custom_call.1} parent=1 // pred_region
      _
    $region13: #{tpu_custom_call.1} parent=1 // pred_fallthru
      _
    // Predicated region
    $region14: #{tpu_custom_call.1} parent=1 // pred_check
      _
    $region15: #{tpu_custom_call.1} parent=1 // pred_check_branch
      %40 = sbr.rel (0) target = $region17
    $region16: #{tpu_custom_call.1} parent=1 // pred_region
      %s42 = ssub.s32 256, 256
      %43 = vsyncadd [#allocation6], %s42
      %s44 = sshll.u32 [#allocation7], 4
      %s45 = int_to_ptr.vmem [resolvable:$true] %s44
      %50 = dma.hbm_to_vmem [thread:$0]  %s3, 256, %s45, [#allocation6], 64, 64, 4
    $region17: #{tpu_custom_call.1} parent=1 // pred_fallthru
      _
    // Predicated region
    $region18: #{tpu_custom_call.1} parent=1 // pred_check
      _
    $region19: #{tpu_custom_call.1} parent=1 // pred_check_branch
      %52 = sbr.rel (0) target = $region21
    $region20: #{tpu_custom_call.1} parent=1 // pred_region
      _
    $region21: #{tpu_custom_call.1} parent=1 // pred_fallthru
      _
    // Predicated region
    $region22: #{tpu_custom_call.1} parent=1 // pred_check
      _
    $region23: #{tpu_custom_call.1} parent=1 // pred_check_branch
      %54 = sbr.rel (0) target = $region25
    $region24: #{tpu_custom_call.1} parent=1 // pred_region
      %55 = dma.done [#allocation3], 256
    $region25: #{tpu_custom_call.1} parent=1 // pred_fallthru
      _
    // Predicated region
    $region26: #{tpu_custom_call.1} parent=1 // pred_check
      _
    $region27: #{tpu_custom_call.1} parent=1 // pred_check_branch
      %57 = sbr.rel (0) target = $region29
    $region28: #{tpu_custom_call.1} parent=1 // pred_region
      %58 = dma.done [#allocation6], 256
    $region29: #{tpu_custom_call.1} parent=1 // pred_fallthru
      _
    // Predicated region
    $region30: #{tpu_custom_call.1} parent=1 // pred_check
      _
    $region31: #{tpu_custom_call.1} parent=1 // pred_check_branch
      %60 = sbr.rel (0) target = $region33
    $region32: #{tpu_custom_call.1} parent=1 // pred_region
      %61 = dma.done [#allocation6], 256
    $region33: #{tpu_custom_call.1} parent=1 // pred_fallthru
      _
    %v63 = vld [vmem:[#allocation2] sm:$0xff]
    %v64 = vld [vmem:[#allocation2 + $0x8] sm:$0xff]
    %v65 = vld [vmem:[#allocation5] sm:$0xf]
    %v66 = vld [vmem:[#allocation5 + $0x4] sm:$0xf]
    %v67 = vld [vmem:[#allocation5 + $0x8] sm:$0xf]
    %v68 = vld [vmem:[#allocation5 + $0xc] sm:$0xf]
    %v69 = vld [vmem:[%s2] sm:$0x7]
    %v70 = vpack.c.bf16 %v64, %v63
    %v71 = vlaneseq
    %v72 = vshrl.u32 %v71, 7
    %v73 = vsub.s32 0, %v72
    %v74 = vrot.slane %v69, %v73
    %v79 = vunpack.c.l.b16 %v65
    %v80 = vunpack.c.l.b16 %v66
    %v81 = vunpack.c.l.b16 %v67
    %v82 = vunpack.c.l.b16 %v68
    %v83 = vpack.c.b16 %v80, %v79
    %v84 = vpack.c.b16 %v82, %v81
    %vm87 = vcmask 261120
    %v89 = vsel %vm87, %v70, 0
    %91 = vmatprep.subr.bf16.mxu0 0
    %92 = vmatpush1.bf16.msra.mxu0 %v83
    %93 = vmatprep.subr.bf16.mxu0 0
    %94 = vmatpush1.bf16.msra.mxu0 %v84
    %95 = vmatprep.subr.bf16.mxu0 0
    %96 = vmatpush1.bf16.msra.mxu0 0
    %97 = vmatprep.subr.bf16.mxu0 0
    %98 = vmatpush1.bf16.msra.mxu0 0
    %99 = vmatprep.subr.bf16.mxu0 0
    %100 = vmatpush1.bf16.msra.mxu0 0
    %101 = vmatprep.subr.bf16.mxu0 0
    %102 = vmatpush1.bf16.msra.mxu0 0
    %103 = vmatprep.subr.bf16.mxu0 0
    %104 = vmatpush1.bf16.msra.mxu0 0
    %105 = vmatprep.subr.bf16.mxu0 0
    %106 = vmatpush1.bf16.msra.mxu0 0
    %107 = vmatprep.subr.bf16.mxu0 0
    %108 = vmatpush1.bf16.msra.mxu0 0
    %109 = vmatprep.subr.bf16.mxu0 0
    %110 = vmatpush1.bf16.msra.mxu0 0
    %111 = vmatprep.subr.bf16.mxu0 0
    %112 = vmatpush1.bf16.msra.mxu0 0
    %113 = vmatprep.subr.bf16.mxu0 0
    %114 = vmatpush1.bf16.msra.mxu0 0
    %115 = vmatprep.subr.bf16.mxu0 0
    %116 = vmatpush1.bf16.msra.mxu0 0
    %117 = vmatprep.subr.bf16.mxu0 0
    %118 = vmatpush1.bf16.msra.mxu0 0
    %119 = vmatprep.subr.bf16.mxu0 0
    %120 = vmatpush1.bf16.msra.mxu0 0
    %121 = vmatprep.subr.bf16.mxu0 0
    %122 = vmatpush1.bf16.msra.mxu0 0
    %123 = vmatprep.mubr.bf16.mxu0 0
    %124 = vmatmul.mubr.bf16.gmra.mrb[0].mxu0 %v89
    %v125 = vpop.f32.mrb[0].mxu0
    %v126 = vadd.f32 %v74, %v125
    %v127 = vpop.f32.mrb[0].mxu0
    %v128 = vpop.f32.mrb[0].mxu0
    %v129 = vadd.f32 %v74, %v128
    %v130 = vpop.f32.mrb[0].mxu0
    %131 = vdwg.mxu0
    %v132 = vmul.f32 %v126, 0.5
    %v133 = vmul.f32 %v129, 0.5
    %v134 = vmul.f32 %v126, 0.70710677
    %v135 = vmul.f32 %v129, 0.70710677
    %v136 = verf.f32.pop %v134
    %v137 = verf.f32.pop %v135
    %v138 = vadd.f32 %v136, 1.0
    %v139 = vadd.f32 %v137, 1.0
    %v140 = vmul.f32 %v132, %v138
    %v141 = vmul.f32 %v133, %v139
    %v142 = vsel %vm87, %v140, 0.0
    %143 = vadd.xlane.f32.xlu0 %v142
    %v144 = vpop.xlane.xlu0 %143
    %v145 = vsel %vm87, %v141, 0.0
    %146 = vadd.xlane.f32.xlu0 %v145
    %v147 = vpop.xlane.xlu0 %146
    %v148 = vrcp.pop 32.0
    %v149 = vmul.f32 %v144, %v148
    %v150 = vmul.f32 %v147, %v148
    %v151 = vsub.f32 %v140, %v149
    %v152 = vsub.f32 %v141, %v150
    %v153 = vmul.f32 %v151, %v151
    %v154 = vmul.f32 %v152, %v152
    %v155 = vsel %vm87, %v153, 0.0
    %156 = vadd.xlane.f32.xlu0 %v155
    %v157 = vpop.xlane.xlu0 %156
    %v158 = vsel %vm87, %v154, 0.0
    %159 = vadd.xlane.f32.xlu0 %v158
    %v160 = vpop.xlane.xlu0 %159
    %v161 = vmul.f32 %v157, %v148
    %v162 = vmul.f32 %v160, %v148
    %v163 = vadd.f32 %v161, 1e-12
    %v164 = vadd.f32 %v162, 1e-12
    %v165 = vrsqrt.pop %v163
    %v166 = vrsqrt.pop %v164
    %v167 = vmul.f32 %v151, %v165
    %v168 = vmul.f32 %v152, %v166
    %v169 = vlaneseq
    %v170 = vshrl.u32 %v169, 7
    %v171 = vsub.s32 1, %v170
    %v172 = vrot.slane %v69, %v171
    %v173 = vmul.f32 %v172, %v167
    %v174 = vmul.f32 %v172, %v168
    %v175 = vlaneseq
    %v176 = vshrl.u32 %v175, 7
    %v177 = vsub.s32 2, %v176
    %v178 = vrot.slane %v69, %v177
    %v179 = vadd.f32 %v173, %v178
    %v180 = vadd.f32 %v174, %v178
    %v181 = vpack.c.bf16 %v180, %v179
    %v182 = vld [vmem:[#allocation7] sm:$0xf]
    %v183 = vld [vmem:[#allocation7 + $0x4] sm:$0xf]
    %v184 = vld [vmem:[#allocation7 + $0x8] sm:$0xf]
    %v185 = vld [vmem:[#allocation7 + $0xc] sm:$0xf]
    %v186 = vld [vmem:[%s4] sm:$0x1]
    %v188 = vlaneseq
    %v189 = vshrl.u32 %v188, 7
    %v190 = vsub.s32 0, %v189
    %v191 = vrot.slane %v186, %v190
    %v197 = vunpack.c.l.b16 %v182
    %v198 = vunpack.c.l.b16 %v183
    %v199 = vunpack.c.l.b16 %v184
    %v200 = vunpack.c.l.b16 %v185
    %v201 = vpack.c.b16 %v198, %v197
    %v202 = vpack.c.b16 %v200, %v199
    %v206 = vsel %vm87, %v181, 0
    %208 = vmatprep.subr.bf16.mxu0 0
    %209 = vmatpush1.bf16.msra.mxu0 %v201
    %210 = vmatprep.subr.bf16.mxu0 0
    %211 = vmatpush1.bf16.msra.mxu0 %v202
    %212 = vmatprep.subr.bf16.mxu0 0
    %213 = vmatpush1.bf16.msra.mxu0 0
    %214 = vmatprep.subr.bf16.mxu0 0
    %215 = vmatpush1.bf16.msra.mxu0 0
    %216 = vmatprep.subr.bf16.mxu0 0
    %217 = vmatpush1.bf16.msra.mxu0 0
    %218 = vmatprep.subr.bf16.mxu0 0
    %219 = vmatpush1.bf16.msra.mxu0 0
    %220 = vmatprep.subr.bf16.mxu0 0
    %221 = vmatpush1.bf16.msra.mxu0 0
    %222 = vmatprep.subr.bf16.mxu0 0
    %223 = vmatpush1.bf16.msra.mxu0 0
    %224 = vmatprep.subr.bf16.mxu0 0
    %225 = vmatpush1.bf16.msra.mxu0 0
    %226 = vmatprep.subr.bf16.mxu0 0
    %227 = vmatpush1.bf16.msra.mxu0 0
    %228 = vmatprep.subr.bf16.mxu0 0
    %229 = vmatpush1.bf16.msra.mxu0 0
    %230 = vmatprep.subr.bf16.mxu0 0
    %231 = vmatpush1.bf16.msra.mxu0 0
    %232 = vmatprep.subr.bf16.mxu0 0
    %233 = vmatpush1.bf16.msra.mxu0 0
    %234 = vmatprep.subr.bf16.mxu0 0
    %235 = vmatpush1.bf16.msra.mxu0 0
    %236 = vmatprep.subr.bf16.mxu0 0
    %237 = vmatpush1.bf16.msra.mxu0 0
    %238 = vmatprep.subr.bf16.mxu0 0
    %239 = vmatpush1.bf16.msra.mxu0 0
    %240 = vmatprep.mubr.bf16.mxu0 0
    %241 = vmatmul.mubr.bf16.gmra.mrb[0].mxu0 %v206
    %v242 = vpop.f32.mrb[0].mxu0
    %v243 = vadd.f32 %v191, %v242
    %v244 = vpop.f32.mrb[0].mxu0
    %v245 = vpop.f32.mrb[0].mxu0
    %v246 = vadd.f32 %v191, %v245
    %v247 = vpop.f32.mrb[0].mxu0
    %248 = vdwg.mxu0
    %249 = vst [vmem:[#allocation8] sm:$0xff] %v243
    %250 = vst [vmem:[#allocation8 + $0x8] sm:$0xff] %v246
    // Predicated region
    $region34: #{tpu_custom_call.1} parent=1 // pred_check
      _
    $region35: #{tpu_custom_call.1} parent=1 // pred_check_branch
      %252 = sbr.rel (0) target = $region37
    $region36: #{tpu_custom_call.1} parent=1 // pred_region
      %s254 = ssub.s32 256, 256
      %255 = vsyncadd [#allocation4], %s254
      %s256 = sshll.u32 [#allocation8], 4
      %s257 = int_to_ptr.vmem [resolvable:$true] %s256
      %262 = dma.vmem_to_hbm [thread:$0]  %s257, 256, %s5, [#allocation4], 128, 128, 8
    $region37: #{tpu_custom_call.1} parent=1 // pred_fallthru
      _
    // Predicated region
    $region38: #{tpu_custom_call.1} parent=1 // pred_check
      _
    $region39: #{tpu_custom_call.1} parent=1 // pred_check_branch
      %264 = sbr.rel (0) target = $region41
    $region40: #{tpu_custom_call.1} parent=1 // pred_region
      %265 = dma.done [#allocation4], 256
    $region41: #{tpu_custom_call.1} parent=1 // pred_fallthru
      _
    %266 = vsyncpa [#allocation3], 1
    %267 = vsyncpa [#allocation6], 1
    %268 = vsyncpa [#allocation4], 1

</llo_original>
